<compile_context>
chip_gen: v7x
topology: tpu7x:2x2x1
jax: 0.10.0
libtpu: 0.0.40
codegen_flags: <defaults>
</compile_context>

<pallas_src>
import jax
import jax.numpy as jnp
from jax.experimental import pallas as pl
from jax.experimental.pallas import tpu as pltpu


# --------------------------------------------------------------------------- #
# helpers
# --------------------------------------------------------------------------- #
def _round_up(v, m):
    return ((v + m - 1) // m) * m


def _tpu_hw_info():
    """(vmem_capacity_bytes, num_tensorcores) — best effort, never raises."""
    vmem_bytes = 128 << 20
    num_cores = 1
    try:
        info = pltpu.get_tpu_info()
        vmem_bytes = int(getattr(info, "vmem_capacity_bytes", vmem_bytes))
        for attr in ("num_cores", "tensorcores_per_chip", "core_count"):
            v = getattr(info, attr, None)
            if v:
                num_cores = int(v)
                break
    except Exception:
        pass
    if num_cores == 1 and vmem_bytes <= (64 << 20):
        num_cores = 2  # v7x heuristic: 64 MiB-per-TC parts have 2 TensorCores
    return vmem_bytes, num_cores


def _default_budgets(vmem_bytes):
    """(tile_budget_bytes, vmem_limit_bytes) per generation."""
    if vmem_bytes >= (128 << 20):        # v5e / v6e: 128 MiB physical VMEM
        return 48 << 20, 96 << 20
    return 36 << 20, 56 << 20            # v7x: 64 MiB per TensorCore


def _balance_block(dim, blk, align, other_steps, num_cores):
    """Shrink a parallel-axis block so the total grid step count divides across
    the chip's TensorCores (v7x megacore).  No-op on single-TC parts, on
    unaligned (full-extent) blocks, or when the grid is already large."""
    if num_cores < 2 or blk < 2 * align or blk % align != 0:
        return blk
    steps = -(-dim // blk)
    total = steps * other_steps
    if total % num_cores == 0 or total >= 4 * num_cores:
        return blk
    cand = blk - align
    while cand >= align:
        s = -(-dim // cand)
        if (s * other_steps) % num_cores == 0:
            return cand
        cand -= align
    return blk


def _fold_scale_shift(weight, bias, running_mean, running_var,
                      film_gamma, film_beta, N, C, eps):
    """Fold BN + FiLM into per-(n, c) scale/shift in f32 (tiny: N*C elems)."""
    f32 = jnp.float32
    s_bn = weight.astype(f32) * jax.lax.rsqrt(running_var.astype(f32) + eps)
    b_bn = bias.astype(f32) - running_mean.astype(f32) * s_bn
    if film_gamma is not None:
        g = 1.0 + film_gamma.astype(f32)            # (N, C)
        bt = film_beta.astype(f32)                  # (N, C)
        scale = s_bn[None, :] * g
        shift = b_bn[None, :] * g + bt
    else:
        scale = jnp.broadcast_to(s_bn[None, :], (N, C))
        shift = jnp.broadcast_to(b_bn[None, :], (N, C))
    return scale, shift                              # (N, C) f32 each


# --------------------------------------------------------------------------- #
# kernels
# --------------------------------------------------------------------------- #
def _make_nhwc_kernel(has_residual, apply_relu):
    """out = [relu]( x * scale + shift [+ residual] ); blocks (1, bhw, bc)."""
    if has_residual:
        def kernel(x_ref, r_ref, scale_ref, shift_ref, o_ref):
            y = x_ref[...].astype(jnp.float32) * scale_ref[...] + shift_ref[...]
            y = y + r_ref[...].astype(jnp.float32)
            if apply_relu:
                y = jnp.maximum(y, 0.0)
            o_ref[...] = y.astype(o_ref.dtype)
    else:
        def kernel(x_ref, scale_ref, shift_ref, o_ref):
            y = x_ref[...].astype(jnp.float32) * scale_ref[...] + shift_ref[...]
            if apply_relu:
                y = jnp.maximum(y, 0.0)
            o_ref[...] = y.astype(o_ref.dtype)
    return kernel


def _make_nchw_kernel(has_residual, apply_relu):
    """Blocks (br, bc); scale/shift packed as a (br, 2) column pair."""
    if has_residual:
        def kernel(x_ref, r_ref, ss_ref, o_ref):
            ss = ss_ref[...]                          # (br, 2) f32
            y = x_ref[...].astype(jnp.float32) * ss[:, 0:1] + ss[:, 1:2]
            y = y + r_ref[...].astype(jnp.float32)
            if apply_relu:
                y = jnp.maximum(y, 0.0)
            o_ref[...] = y.astype(o_ref.dtype)
    else:
        def kernel(x_ref, ss_ref, o_ref):
            ss = ss_ref[...]
            y = x_ref[...].astype(jnp.float32) * ss[:, 0:1] + ss[:, 1:2]
            if apply_relu:
                y = jnp.maximum(y, 0.0)
            o_ref[...] = y.astype(o_ref.dtype)
    return kernel


# --------------------------------------------------------------------------- #
# layout-specific drivers
# --------------------------------------------------------------------------- #
def _run_nhwc(x, residual, scale, shift, apply_relu,
              tile_budget_bytes, vmem_limit_bytes, num_cores):
    N, H, W, C = x.shape
    HW = H * W
    x3 = x.reshape(N, HW, C)
    res3 = residual.reshape(N, HW, C) if residual is not None else None
    scale3 = scale.reshape(N, 1, C)
    shift3 = shift.reshape(N, 1, C)

    itemsize = jnp.dtype(x.dtype).itemsize
    sub = {4: 8, 2: 16, 1: 32}.get(itemsize, 8)
    n_streams = 3 if res3 is not None else 2          # x (+res) + out
    max_tile_elems = max(tile_budget_bytes // (2 * n_streams * itemsize),
                         sub * 128)

    # Lane axis = channels (zero lane padding for ResNet's 64..512 channels).
    if C <= 128 or C * sub <= max_tile_elems:
        bc = C                                         # full-extent last dim
    else:
        bc = min((C // 128) * 128,
                 max(128, ((max_tile_elems // sub) // 128) * 128))
    rows = max(max_tile_elems // bc, 1)
    if rows >= HW or HW <= sub:
        bhw = HW                                       # full-extent spatial dim
    else:
        bhw = max(sub, min((rows // sub) * sub, (HW // sub) * sub))

    grid_c = pl.cdiv(C, bc)
    bhw = _balance_block(HW, bhw, sub, N * grid_c, num_cores)
    grid_hw = pl.cdiv(HW, bhw)
    grid = (N, grid_c, grid_hw)                        # HW innermost: scale is
                                                       # DMA'd once per (n, cj)

    big = pl.BlockSpec((1, bhw, bc), lambda n, cj, hi: (n, hi, cj))
    par = pl.BlockSpec((1, 1, bc), lambda n, cj, hi: (n, 0, cj))

    kernel = _make_nhwc_kernel(res3 is not None, apply_relu)
    if res3 is not None:
        inputs = (x3, res3, scale3, shift3)
        in_specs = [big, big, par, par]
    else:
        inputs = (x3, scale3, shift3)
        in_specs = [big, par, par]

    elems = N * HW * C
    flops = elems * (2 + (1 if res3 is not None else 0) + (1 if apply_relu else 0))
    bytes_acc = elems * itemsize * n_streams + 2 * N * C * 4
    cost = pl.CostEstimate(flops=flops, transcendentals=0,
                           bytes_accessed=bytes_acc)

    out = pl.pallas_call(
        kernel,
        out_shape=jax.ShapeDtypeStruct((N, HW, C), x.dtype),
        grid_spec=pltpu.PrefetchScalarGridSpec(
            num_scalar_prefetch=0,
            grid=grid,
            in_specs=in_specs,
            out_specs=big,
        ),
        compiler_params=pltpu.CompilerParams(
            dimension_semantics=("parallel", "parallel", "parallel"),
            vmem_limit_bytes=vmem_limit_bytes,
        ),
        cost_estimate=cost,
    )(*inputs)
    return out.reshape(N, H, W, C)


def _run_nchw(x, residual, scale, shift, apply_relu,
              tile_budget_bytes, vmem_limit_bytes, num_cores):
    N, C, H, W = x.shape
    NC, HW = N * C, H * W
    x2 = x.reshape(NC, HW)
    res2 = residual.reshape(NC, HW) if residual is not None else None
    # Pack scale & shift into one (NC, 2) f32 array: one small DMA per row
    # block instead of two 1-lane-wide ones.
    ss = jnp.stack([scale.reshape(NC), shift.reshape(NC)], axis=-1)

    itemsize = jnp.dtype(x.dtype).itemsize
    sub = {4: 8, 2: 16, 1: 32}.get(itemsize, 8)
    n_streams = 3 if res2 is not None else 2
    max_tile_elems = max(tile_budget_bytes // (2 * n_streams * itemsize),
                         sub * 128)

    # Full-HW last block dim when it fits (no pad, at most one masked tail
    # store per row).  Otherwise tile HW in 128-lane multiples and let Pallas
    # mask the ragged tail block — never jnp.pad / slice in the wrapper.
    if HW <= 128 or HW * sub <= max_tile_elems:
        bc = HW
    else:
        bc = min((HW // 128) * 128,
                 max(128, ((max_tile_elems // sub) // 128) * 128))
    rows = max(max_tile_elems // bc, 1)
    if NC <= sub:
        br = NC                                        # full-extent row dim
    else:
        br = max(sub, min((rows // sub) * sub, (NC // sub) * sub))

    grid_c = pl.cdiv(HW, bc)
    br = _balance_block(NC, br, sub, grid_c, num_cores)
    grid_r = pl.cdiv(NC, br)
    grid = (grid_r, grid_c)

    big = pl.BlockSpec((br, bc), lambda i, j: (i, j))
    par = pl.BlockSpec((br, 2), lambda i, j: (i, 0))

    kernel = _make_nchw_kernel(res2 is not None, apply_relu)
    if res2 is not None:
        inputs = (x2, res2, ss)
        in_specs = [big, big, par]
    else:
        inputs = (x2, ss)
        in_specs = [big, par]

    elems = NC * HW
    flops = elems * (2 + (1 if res2 is not None else 0) + (1 if apply_relu else 0))
    bytes_acc = elems * itemsize * n_streams + NC * 2 * 4
    cost = pl.CostEstimate(flops=flops, transcendentals=0,
                           bytes_accessed=bytes_acc)

    out = pl.pallas_call(
        kernel,
        out_shape=jax.ShapeDtypeStruct((NC, HW), x.dtype),
        grid_spec=pltpu.PrefetchScalarGridSpec(
            num_scalar_prefetch=0,
            grid=grid,
            in_specs=in_specs,
            out_specs=big,
        ),
        compiler_params=pltpu.CompilerParams(
            dimension_semantics=("parallel", "parallel"),
            vmem_limit_bytes=vmem_limit_bytes,
        ),
        cost_estimate=cost,
    )(*inputs)
    return out.reshape(N, C, H, W)


# --------------------------------------------------------------------------- #
# public API
# --------------------------------------------------------------------------- #
def fused_bn_film_act(x, weight, bias, running_mean, running_var, *,
                      film_gamma=None, film_beta=None, residual=None,
                      apply_relu=False, eps=1e-5, data_format="NCHW",
                      tile_budget_bytes=None, vmem_limit_bytes=None):
    """Fused frozen-BN affine + FiLM + residual + ReLU epilogue.

    x: (N, C, H, W) for data_format="NCHW" or (N, H, W, C) for "NHWC"
       (NHWC is the TPU-preferred layout: channels on the lane axis).
    BN params: (C,).  film_gamma/beta: (N, C).  residual: same shape as x.

    Computes relu?((x * s_bn + b_bn) * (1 + gamma) + beta + residual) with
    s_bn = w * rsqrt(rv + eps), b_bn = b - rm * s_bn, all folded into a single
    per-(n, c) f32 scale/shift pair outside the kernel.
    """
    vmem_cap, num_cores = _tpu_hw_info()
    dflt_budget, dflt_limit = _default_budgets(vmem_cap)
    if tile_budget_bytes is None:
        tile_budget_bytes = dflt_budget
    if vmem_limit_bytes is None:
        vmem_limit_bytes = dflt_limit

    if data_format == "NCHW":
        N, C, H, W = x.shape
    elif data_format == "NHWC":
        N, H, W, C = x.shape
    else:
        raise ValueError(f"unknown data_format: {data_format!r}")

    scale, shift = _fold_scale_shift(weight, bias, running_mean, running_var,
                                     film_gamma, film_beta, N, C, eps)

    if data_format == "NHWC":
        return _run_nhwc(x, residual, scale, shift, apply_relu,
                         tile_budget_bytes, vmem_limit_bytes, num_cores)
    return _run_nchw(x, residual, scale, shift, apply_relu,
                     tile_budget_bytes, vmem_limit_bytes, num_cores)


def frozen_batch_norm_2d(x, weight, bias, running_mean, running_var, *,
                         eps=1e-5, data_format="NCHW"):
    """Plain eval-mode BatchNorm2d / FrozenBatchNorm2d affine (no FiLM / relu).

    NOTE: in the full backbone graph, prefer letting XLA fuse this affine into
    the producing convolution; the standalone Pallas call only pays off when
    it also fuses FiLM / residual / ReLU work."""
    return fused_bn_film_act(x, weight, bias, running_mean, running_var,
                             eps=eps, data_format=data_format)


# --------------------------------------------------------------------------- #
# pure-JAX references
# --------------------------------------------------------------------------- #
def _reference_bn(x, w, b, rm, rv, eps=1e-5):
    f32 = jnp.float32
    w = w.astype(f32).reshape(1, -1, 1, 1)
    b = b.astype(f32).reshape(1, -1, 1, 1)
    rm = rm.astype(f32).reshape(1, -1, 1, 1)
    rv = rv.astype(f32).reshape(1, -1, 1, 1)
    scale = w * jax.lax.rsqrt(rv + eps)
    shift = b - rm * scale
    return (x.astype(f32) * scale + shift).astype(x.dtype)


def _reference_fused(x, w, b, rm, rv, gamma, beta, residual, eps=1e-5):
    y = _reference_bn(x, w, b, rm, rv, eps).astype(jnp.float32)
    g = (1.0 + gamma.astype(jnp.float32))[:, :, None, None]
    bt = beta.astype(jnp.float32)[:, :, None, None]
    y = y * g + bt + residual.astype(jnp.float32)
    y = jnp.maximum(y, 0.0)
    return y.astype(x.dtype)


# --------------------------------------------------------------------------- #
if __name__ == "__main__":
    key = jax.random.PRNGKey(0)
    keys = jax.random.split(key, 10)

    N, C, H, W = 2, 4, 16, 16
    x = jax.random.normal(keys[0], (N, C, H, W), dtype=jnp.float32)
    weight = 1.0 + 0.1 * jax.random.normal(keys[1], (C,), jnp.float32)
    bias = 0.1 * jax.random.normal(keys[2], (C,), jnp.float32)
    running_mean = 0.1 * jax.random.normal(keys[3], (C,), jnp.float32)
    running_var = 1.0 + 0.05 * jax.random.uniform(keys[4], (C,), jnp.float32)
    film_gamma = 0.1 * jax.random.normal(keys[5], (N, C), jnp.float32)
    film_beta = 0.1 * jax.random.normal(keys[6], (N, C), jnp.float32)
    residual = jax.random.normal(keys[7], (N, C, H, W), dtype=jnp.float32)

    # 1) plain frozen-BN affine (NCHW layout).
    y_bn = jax.block_until_ready(
        frozen_batch_norm_2d(x, weight, bias, running_mean, running_var))
    y_bn_ref = _reference_bn(x, weight, bias, running_mean, running_var)
    assert y_bn.shape == (N, C, H, W)
    assert jnp.allclose(y_bn, y_bn_ref, atol=1e-5, rtol=1e-5)

    # 2) fused BN + FiLM + residual + ReLU epilogue, NCHW layout.
    y_f = jax.block_until_ready(fused_bn_film_act(
        x, weight, bias, running_mean, running_var,
        film_gamma=film_gamma, film_beta=film_beta,
        residual=residual, apply_relu=True))
    y_f_ref = _reference_fused(x, weight, bias, running_mean, running_var,
                               film_gamma, film_beta, residual)
    assert y_f.shape == (N, C, H, W)
    assert jnp.allclose(y_f, y_f_ref, atol=1e-5, rtol=1e-5)

    # 3) TPU-preferred NHWC layout (channels on lanes) with a ragged 7x7
    #    spatial extent like the deepest ResNet stage.
    N2, C2, H2, W2 = 2, 8, 7, 7
    x2 = jax.random.normal(keys[8], (N2, C2, H2, W2), dtype=jnp.float32)
    res2 = jax.random.normal(keys[9], (N2, C2, H2, W2), dtype=jnp.float32)
    w2 = 1.0 + 0.1 * jax.random.normal(keys[1], (C2,), jnp.float32)
    b2 = 0.1 * jax.random.normal(keys[2], (C2,), jnp.float32)
    rm2 = 0.1 * jax.random.normal(keys[3], (C2,), jnp.float32)
    rv2 = 1.0 + 0.05 * jax.random.uniform(keys[4], (C2,), jnp.float32)
    g2 = 0.1 * jax.random.normal(keys[5], (N2, C2), jnp.float32)
    bt2 = 0.1 * jax.random.normal(keys[6], (N2, C2), jnp.float32)

    y2_nhwc = jax.block_until_ready(fused_bn_film_act(
        jnp.transpose(x2, (0, 2, 3, 1)), w2, b2, rm2, rv2,
        film_gamma=g2, film_beta=bt2,
        residual=jnp.transpose(res2, (0, 2, 3, 1)),
        apply_relu=True, data_format="NHWC"))
    y2_ref = _reference_fused(x2, w2, b2, rm2, rv2, g2, bt2, res2)
    assert y2_nhwc.shape == (N2, H2, W2, C2)
    assert jnp.allclose(jnp.transpose(y2_nhwc, (0, 3, 1, 2)), y2_ref,
                        atol=1e-5, rtol=1e-5)

    # 4) multi-tile NCHW grid with ragged 14x14 spatial dim (tiny tile budget
    #    forces a 2x2 grid and masked tail blocks — no pad / slice anywhere).
    N3, C3, H3, W3 = 2, 8, 14, 14
    x3 = jax.random.normal(keys[8], (N3, C3, H3, W3), dtype=jnp.float32)
    res3 = jax.random.normal(keys[9], (N3, C3, H3, W3), dtype=jnp.float32)
    y3 = jax.block_until_ready(fused_bn_film_act(
        x3, w2, b2, rm2, rv2, film_gamma=g2, film_beta=bt2,
        residual=res3, apply_relu=True,
        tile_budget_bytes=24 * 1024))
    y3_ref = _reference_fused(x3, w2, b2, rm2, rv2, g2, bt2, res3)
    assert y3.shape == (N3, C3, H3, W3)
    assert jnp.allclose(y3, y3_ref, atol=1e-5, rtol=1e-5)

    print("KERNEL_OK")
</pallas_src>

<mosaic_0001>
module attributes {stable_mosaic.version = 11 : i64} {
  func.func @kernel(%arg0: i32, %arg1: i32, %arg2: memref<8x256xf32, #tpu.memory_space<vmem>>, %arg3: memref<8x2xf32, #tpu.memory_space<vmem>>, %arg4: memref<8x256xf32, #tpu.memory_space<vmem>>) attributes {dimension_semantics = [#tpu.dimension_semantics<parallel>, #tpu.dimension_semantics<parallel>], iteration_bounds = array<i64: 1, 1>, scalar_prefetch = 0 : i64, scratch_operands = 0 : i64, tpu.core_type = #tpu.core_type<tc>, window_params = [{transform_indices = @transform_0, window_bounds = array<i64: 8, 256>}, {transform_indices = @transform_1, window_bounds = array<i64: 8, 2>}, {transform_indices = @transform_2, window_bounds = array<i64: 8, 256>}]} {
    %c0 = arith.constant 0 : index
    %c0_0 = arith.constant 0 : index
    %0 = vector.load %arg3[%c0, %c0_0] : memref<8x2xf32, #tpu.memory_space<vmem>>, vector<8x2xf32>
    %c0_1 = arith.constant 0 : index
    %c0_2 = arith.constant 0 : index
    %1 = vector.load %arg2[%c0_1, %c0_2] : memref<8x256xf32, #tpu.memory_space<vmem>>, vector<8x256xf32>
    %2 = vector.extract_strided_slice %0 {offsets = [0, 0], sizes = [8, 1], strides = [1, 1]} : vector<8x2xf32> to vector<8x1xf32>
    %3 = vector.broadcast %2 : vector<8x1xf32> to vector<8x256xf32>
    %4 = arith.mulf %1, %3 : vector<8x256xf32>
    %5 = vector.extract_strided_slice %0 {offsets = [0, 1], sizes = [8, 1], strides = [1, 1]} : vector<8x2xf32> to vector<8x1xf32>
    %6 = vector.broadcast %5 : vector<8x1xf32> to vector<8x256xf32>
    %7 = arith.addf %4, %6 : vector<8x256xf32>
    %c0_3 = arith.constant 0 : index
    %c0_4 = arith.constant 0 : index
    %8 = vector.load %arg4[%c0_3, %c0_4] : memref<8x256xf32, #tpu.memory_space<vmem>>, vector<8x256xf32>
    tpu.vector_store %arg4[%c0_3, %c0_4], %7 {strides = array<i32>} : memref<8x256xf32, #tpu.memory_space<vmem>>, vector<8x256xf32>,
    return
  }
  func.func @transform_0(%arg0: i32, %arg1: i32) -> (i32, i32) {
    %c0_i32 = arith.constant 0 : i32
    return %arg0, %arg1 : i32, i32
  }
  func.func @transform_1(%arg0: i32, %arg1: i32) -> (i32, i32) {
    %c0_i32 = arith.constant 0 : i32
    %c0_i32_0 = arith.constant 0 : i32
    return %arg0, %c0_i32 : i32, i32
  }
  func.func @transform_2(%arg0: i32, %arg1: i32) -> (i32, i32) {
    %c0_i32 = arith.constant 0 : i32
    return %arg0, %arg1 : i32, i32
  }
}

</mosaic_0001>

<llo_original>
// kernel: tpu_custom_call.1
$region0: #{tpu_custom_call.1}
  #allocation0 [shape = 'u32[]', space=smem, size = 0x4, offset = 0x4, fixed_abs, tag = 'smem constant byte address 0x4 - core index']
  #allocation1 [shape = 'u32[144,128]{1,0:T(1,128)}', space=vmem, size = 0x12000, scoped, tag = 'internal scratch']
  %s0 = inlined_call_operand.hbm [shape: f32[8,256], index: 0, kind: input, shape index: {}]
  %s1 = inlined_call_operand.hbm [shape: f32[8,2], index: 1, kind: input, shape index: {}]
  %s2 = inlined_call_operand.hbm [shape: f32[8,256], index: 2, kind: output, shape index: {}]
  %s3 = sld [smem:[#allocation0]]
  $region26: #{tpu_custom_call.1} parent=0
    _
  %s5 = ssub.s32 1, %s3
  %s6 = scalar_select 0, %s5, %s3
  $region1: #{tpu_custom_call.1} parent=0
    #allocation2 [shape = 'u8[8192]{0}', space=vmem, size = 0x2000, scoped, tag = 'input window, operand 0, single buffered']
    #allocation3 [shape = 's32[1]{0}', space=sflag, size = 0x4, scoped, tag = 'scoped memory for tpu_custom_call.1']
    #allocation4 [shape = 's32[1]{0}', space=sflag, size = 0x4, scoped, tag = 'scoped memory for tpu_custom_call.1']
    #allocation5 [shape = 'u8[4096]{0}', space=vmem, size = 0x1000, scoped, tag = 'input window, operand 1, single buffered']
    #allocation6 [shape = 's32[1]{0}', space=sflag, size = 0x4, scoped, tag = 'scoped memory for tpu_custom_call.1']
    #allocation7 [shape = 'u8[8192]{0}', space=vmem, size = 0x2000, scoped, tag = 'output window, operand 0, single buffered']
    %7 = vsyncpa [#allocation3], 0
    %8 = vsyncpa [#allocation6], 0
    %9 = vsyncpa [#allocation4], 0
    // Predicated region
    $region2: #{tpu_custom_call.1} parent=1 // pred_check
      _
    $region3: #{tpu_custom_call.1} parent=1 // pred_check_branch
      %11 = sbr.rel (0) target = $region5
    $region4: #{tpu_custom_call.1} parent=1 // pred_region
      %s13 = ssub.s32 256, 256
      %14 = vsyncadd [#allocation3], %s13
      %s16 = sshll.u32 [#allocation2], 4
      %s17 = int_to_ptr.vmem [resolvable:$true] %s16
      %19 = dma.hbm_to_vmem [thread:$0]  %s0, 256, %s17, [#allocation3]
    $region5: #{tpu_custom_call.1} parent=1 // pred_fallthru
      _
    // Predicated region
    $region6: #{tpu_custom_call.1} parent=1 // pred_check
      _
    $region7: #{tpu_custom_call.1} parent=1 // pred_check_branch
      %21 = sbr.rel (0) target = $region9
    $region8: #{tpu_custom_call.1} parent=1 // pred_region
      %s23 = ssub.s32 128, 128
      %24 = vsyncadd [#allocation6], %s23
      %s26 = sshll.u32 [#allocation5], 4
      %s27 = int_to_ptr.vmem [resolvable:$true] %s26
      %29 = dma.hbm_to_vmem [thread:$0]  %s1, 128, %s27, [#allocation6]
    $region9: #{tpu_custom_call.1} parent=1 // pred_fallthru
      _
    // Predicated region
    $region10: #{tpu_custom_call.1} parent=1 // pred_check
      _
    $region11: #{tpu_custom_call.1} parent=1 // pred_check_branch
      %31 = sbr.rel (0) target = $region13
    $region12: #{tpu_custom_call.1} parent=1 // pred_region
      %32 = dma.done [#allocation3], 256
    $region13: #{tpu_custom_call.1} parent=1 // pred_fallthru
      _
    // Predicated region
    $region14: #{tpu_custom_call.1} parent=1 // pred_check
      _
    $region15: #{tpu_custom_call.1} parent=1 // pred_check_branch
      %34 = sbr.rel (0) target = $region17
    $region16: #{tpu_custom_call.1} parent=1 // pred_region
      %35 = dma.done [#allocation6], 128
    $region17: #{tpu_custom_call.1} parent=1 // pred_fallthru
      _
    %v36 = vld [vmem:[#allocation5] sm:$0xff]
    %v37 = vld [vmem:[#allocation2] sm:$0xff]
    %v38 = vld [vmem:[#allocation2 + $0x8] sm:$0xff]
    %40 = vset.pattern.permute.xlu0 0
    %41 = vperm.xlu0 %40, %v36
    %v42 = vpop.permute.xlu0 %41
    %v44 = vmul.f32 %v37, %v42
    %v45 = vmul.f32 %v38, %v42
    %46 = vset.pattern.permute.xlu0 1
    %47 = vperm.xlu0 %46, %v36
    %v48 = vpop.permute.xlu0 %47
    %v50 = vadd.f32 %v44, %v48
    %v51 = vadd.f32 %v45, %v48
    %52 = vst [vmem:[#allocation7] sm:$0xff] %v50
    %53 = vst [vmem:[#allocation7 + $0x8] sm:$0xff] %v51
    // Predicated region
    $region18: #{tpu_custom_call.1} parent=1 // pred_check
      _
    $region19: #{tpu_custom_call.1} parent=1 // pred_check_branch
      %55 = sbr.rel (0) target = $region21
    $region20: #{tpu_custom_call.1} parent=1 // pred_region
      %s57 = ssub.s32 256, 256
      %58 = vsyncadd [#allocation4], %s57
      %s60 = sshll.u32 [#allocation7], 4
      %s61 = int_to_ptr.vmem [resolvable:$true] %s60
      %63 = dma.vmem_to_hbm [thread:$0]  %s61, 256, %s2, [#allocation4]
    $region21: #{tpu_custom_call.1} parent=1 // pred_fallthru
      _
    // Predicated region
    $region22: #{tpu_custom_call.1} parent=1 // pred_check
      _
    $region23: #{tpu_custom_call.1} parent=1 // pred_check_branch
      %65 = sbr.rel (0) target = $region25
    $region24: #{tpu_custom_call.1} parent=1 // pred_region
      %66 = dma.done [#allocation4], 256
    $region25: #{tpu_custom_call.1} parent=1 // pred_fallthru
      _
    %67 = vsyncpa [#allocation3], 1
    %68 = vsyncpa [#allocation6], 1
    %69 = vsyncpa [#allocation4], 1

</llo_original>
